<compile_context>
chip_gen: v6e
topology: v6e:2x2x1
jax: 0.10.0
libtpu: 0.0.40
codegen_flags: <defaults>
</compile_context>

<pallas_src>
import math
import jax
import jax.numpy as jnp
from jax.experimental import pallas as pl
from jax.experimental.pallas import tpu as pltpu


# --------------------------------------------------------------------------- #
# Kernel                                                                      #
# --------------------------------------------------------------------------- #
def _concat_head_kernel(x_ref, w1_ref, b1_ref, w2_ref, b2_ref, o_ref):
    # dropout (eval) == identity
    x = x_ref[...]  # native dtype straight into the MXU

    # pre_classifier: x @ W1 + b1, f32 accumulation
    h = jnp.dot(x, w1_ref[...], preferred_element_type=jnp.float32)
    h = h + b1_ref[...].astype(jnp.float32)

    # tanh (EUP)
    h = jnp.tanh(h)

    # dropout (eval) == identity
    # out_proj: h @ W2 + b2 (cast h back to weight dtype for the bf16 MXU path)
    out = jnp.dot(h.astype(w2_ref.dtype), w2_ref[...],
                  preferred_element_type=jnp.float32)
    out = out + b2_ref[...].astype(jnp.float32)

    o_ref[...] = out.astype(o_ref.dtype)


# --------------------------------------------------------------------------- #
# Helpers                                                                     #
# --------------------------------------------------------------------------- #
def _cdiv(a, b):
    return -(-a // b)


def _round_up(v, m):
    return _cdiv(v, m) * m


def _vmem_capacity_bytes():
    """Physical per-core VMEM; conservative 64 MiB (v7x) if the query fails."""
    try:
        return int(pltpu.get_tpu_info().vmem_capacity_bytes)
    except Exception:
        return 64 * 1024 * 1024


def prepare_concat_head_params(w1, b1, w2, b2):
    """One-time parameter prep (do NOT call per forward step).

    w1 : (H, C_in)  pre_classifier weight (torch Linear layout), b1 : (H,)
    w2 : (L, H)     out_proj weight,                             b2 : (L,)

    Transposes to matmul layout and zero-pads feature dims to 128-lane
    multiples so both matmuls and the output store stay on the unmasked,
    lane-dense path. Padding here (once) avoids per-call HBM round-trips of
    the weights.
    """
    H, C_in = w1.shape
    L = w2.shape[0]
    C_p, H_p, L_p = _round_up(C_in, 128), _round_up(H, 128), _round_up(L, 128)

    def pad2(a, r, c):
        if a.shape == (r, c):
            return a
        return jnp.pad(a, ((0, r - a.shape[0]), (0, c - a.shape[1])))

    return dict(
        w1=pad2(w1.T, C_p, H_p),
        b1=pad2(b1.reshape(1, -1), 1, H_p),
        w2=pad2(w2.T, H_p, L_p),
        b2=pad2(b2.reshape(1, -1), 1, L_p),
        dims=(C_in, H, L),
    )


# --------------------------------------------------------------------------- #
# Wrapper                                                                     #
# --------------------------------------------------------------------------- #
def concat_head_extended(x, params, *, block_b=None):
    """Fused head forward.

    x      : (B, C_in) concatenated [CLS] hidden states (bf16 preferred on v5e).
    params : output of prepare_concat_head_params().
    returns (B, num_labels)
    """
    C_in, H, L = params["dims"]
    w1_p, b1_p, w2_p, b2_p = params["w1"], params["b1"], params["w2"], params["b2"]
    C_p, H_p = w1_p.shape
    L_p = w2_p.shape[1]

    B = x.shape[0]
    assert x.shape[1] == C_in, f"expected x feature dim {C_in}, got {x.shape[1]}"
    out_dtype = x.dtype

    # ---- generation-aware tiling / VMEM budget --------------------------------
    vmem_cap = _vmem_capacity_bytes()
    vmem_budget = int(0.75 * vmem_cap)          # headroom for Mosaic scratch/sems
    if block_b is None:
        # Bigger tiles on 128-MiB-VMEM parts (v5e/v6e); smaller on v7x (64 MiB).
        block_b = 1024 if vmem_cap >= (100 << 20) else 512

    # Balanced batch tiling: padding waste is bounded by < 8 rows per tile.
    n_tiles = max(1, _cdiv(B, block_b))
    tb = _round_up(_cdiv(B, n_tiles), 8)
    # >= 2 grid steps when batch is big enough -> both v7x TensorCores get work.
    if n_tiles < 2 and tb >= 512:
        n_tiles = 2
        tb = _round_up(_cdiv(B, n_tiles), 8)

    x_isz = jnp.dtype(x.dtype).itemsize
    w_isz = jnp.dtype(w1_p.dtype).itemsize

    def est_vmem(tb_):
        return (2 * tb_ * (C_p + L_p) * x_isz                      # 2x-buffered x/out tiles
                + (C_p * H_p + H_p + H_p * L_p + L_p) * w_isz      # 1x-buffered weights
                + 4 * tb_ * (H_p + L_p))                           # f32 intermediates

    # Shrink the batch tile instead of clamping the VMEM request past capacity.
    while est_vmem(tb) > vmem_budget and tb > 8:
        tb = max(8, _round_up(tb // 2, 8))
    # TODO(synk): if W1 alone exceeds ~1/4 of VMEM (layer2concat*hidden >= ~8K on
    # v7x), add a K-reduction grid axis over C_in with an f32 accumulator scratch
    # instead of shrinking tb into MXU under-utilization.

    n_tiles = _cdiv(B, tb)
    B_p = n_tiles * tb

    # Pad x only when necessary (feature dims are often already x128-aligned).
    if (B_p, C_p) != x.shape:
        x_p = jnp.pad(x, ((0, B_p - B), (0, C_p - C_in)))
    else:
        x_p = x

    vmem_limit = int(min(vmem_budget, max(int(1.5 * est_vmem(tb)), 4 << 20)))

    # Advisory cost for XLA's scheduler (overlap with surrounding encoder ops).
    flops = 2 * B_p * (C_p * H_p + H_p * L_p)
    bytes_accessed = (B_p * C_p * x_isz
                      + (C_p * H_p + H_p + H_p * L_p + L_p) * w_isz
                      + B_p * L_p * jnp.dtype(out_dtype).itemsize)
    cost = pl.CostEstimate(flops=flops, transcendentals=B_p * H_p,
                           bytes_accessed=bytes_accessed)

    def _run(single_buffer_weights):
        if single_buffer_weights:
            # Grid-invariant operands: single-buffer to halve their VMEM footprint.
            def const_spec(shape):
                return pl.BlockSpec(shape, lambda i: (0, 0),
                                    pipeline_mode=pl.Buffered(1))
        else:
            def const_spec(shape):
                return pl.BlockSpec(shape, lambda i: (0, 0))

        return pl.pallas_call(
            _concat_head_kernel,
            out_shape=jax.ShapeDtypeStruct((B_p, L_p), out_dtype),
            grid=(n_tiles,),
            in_specs=[
                pl.BlockSpec((tb, C_p), lambda i: (i, 0)),   # streamed batch tile
                const_spec((C_p, H_p)),                      # VMEM-resident weights
                const_spec((1, H_p)),
                const_spec((H_p, L_p)),
                const_spec((1, L_p)),
            ],
            out_specs=pl.BlockSpec((tb, L_p), lambda i: (i, 0)),
            compiler_params=pltpu.CompilerParams(
                dimension_semantics=("parallel",),   # shards batch tiles across TCs
                vmem_limit_bytes=vmem_limit,
            ),
            cost_estimate=cost,
        )(x_p, w1_p, b1_p, w2_p, b2_p)

    try:
        out_p = _run(True)
    except Exception:
        # pipeline_mode=pl.Buffered(1) not supported on this JAX build; fall back
        # to default double-buffering (correct, slightly larger VMEM footprint).
        out_p = _run(False)

    return out_p[:B, :L]


# --------------------------------------------------------------------------- #
# Test / example                                                              #
# --------------------------------------------------------------------------- #
def _torch_linear_init(key, in_features, out_features, dtype=jnp.float32):
    """Deterministic init matching torch.nn.Linear defaults: U(-1/sqrt(in), 1/sqrt(in))."""
    k_w, k_b = jax.random.split(key)
    bound = 1.0 / math.sqrt(in_features)
    w = jax.random.uniform(k_w, (out_features, in_features), dtype, -bound, bound)
    b = jax.random.uniform(k_b, (out_features,), dtype, -bound, bound)
    return w, b


if __name__ == "__main__":
    # Module-consistent small shapes:
    #   config.hidden_size = 32, layer2concat = 4 -> input dim = 128
    #   last_hidden_size   = 64
    #   num_labels         = 8
    batch = 2
    hidden_size = 32
    layer2concat = 4
    last_hidden_size = 64
    num_labels = 8
    in_dim = layer2concat * hidden_size

    key = jax.random.PRNGKey(0)
    k_x, k_l1, k_l2 = jax.random.split(key, 3)

    x = jax.random.normal(k_x, (batch, in_dim), jnp.float32)
    w1, b1 = _torch_linear_init(k_l1, in_dim, last_hidden_size)
    w2, b2 = _torch_linear_init(k_l2, last_hidden_size, num_labels)

    # ---- f32 path: tight correctness check against the module math --------------
    params = prepare_concat_head_params(w1, b1, w2, b2)     # once, at setup time
    out = jax.block_until_ready(concat_head_extended(x, params))
    ref = jnp.tanh(x @ w1.T + b1) @ w2.T + b2
    assert out.shape == (batch, num_labels)
    assert jnp.allclose(out, ref, atol=1e-5, rtol=1e-5)

    # ---- bf16 path: native MXU dtype (f32 accumulation), loose tolerance --------
    xb = x.astype(jnp.bfloat16)
    w1b, b1b = w1.astype(jnp.bfloat16), b1.astype(jnp.bfloat16)
    w2b, b2b = w2.astype(jnp.bfloat16), b2.astype(jnp.bfloat16)
    params_bf = prepare_concat_head_params(w1b, b1b, w2b, b2b)
    out_bf = jax.block_until_ready(concat_head_extended(xb, params_bf))
    h_ref = jnp.tanh(jnp.dot(xb, w1b.T, preferred_element_type=jnp.float32)
                     + b1b.astype(jnp.float32))
    ref_bf = (jnp.dot(h_ref.astype(jnp.bfloat16), w2b.T,
                      preferred_element_type=jnp.float32)
              + b2b.astype(jnp.float32))
    assert out_bf.shape == (batch, num_labels)
    assert jnp.allclose(out_bf.astype(jnp.float32), ref_bf, atol=1e-1, rtol=1e-1)

    # TODO(synk): training-mode dropout (p=0.1) would need pltpu.prng_seed /
    # pltpu.prng_random_bits; inference path (identity) is implemented here.
    print("KERNEL_OK")
</pallas_src>

<mosaic_0001>
module attributes {stable_mosaic.version = 11 : i64} {
  func.func @_concat_head_kernel(%arg0: i32, %arg1: memref<8x128xf32, #tpu.memory_space<vmem>>, %arg2: memref<128x128xf32, #tpu.memory_space<vmem>>, %arg3: memref<1x128xf32, #tpu.memory_space<vmem>>, %arg4: memref<128x128xf32, #tpu.memory_space<vmem>>, %arg5: memref<1x128xf32, #tpu.memory_space<vmem>>, %arg6: memref<8x128xf32, #tpu.memory_space<vmem>>) attributes {dimension_semantics = [#tpu.dimension_semantics<parallel>], iteration_bounds = array<i64: 1>, scalar_prefetch = 0 : i64, scratch_operands = 0 : i64, tpu.core_type = #tpu.core_type<tc>, window_params = [{transform_indices = @transform_0, window_bounds = array<i64: 8, 128>}, {pipeline_mode = #tpu.pipeline_mode<synchronous>, transform_indices = @transform_1, window_bounds = array<i64: 128, 128>}, {pipeline_mode = #tpu.pipeline_mode<synchronous>, transform_indices = @transform_2, window_bounds = array<i64: 1, 128>}, {pipeline_mode = #tpu.pipeline_mode<synchronous>, transform_indices = @transform_3, window_bounds = array<i64: 128, 128>}, {pipeline_mode = #tpu.pipeline_mode<synchronous>, transform_indices = @transform_4, window_bounds = array<i64: 1, 128>}, {transform_indices = @transform_5, window_bounds = array<i64: 8, 128>}]} {
    %c0 = arith.constant 0 : index
    %c0_0 = arith.constant 0 : index
    %0 = vector.load %arg1[%c0, %c0_0] : memref<8x128xf32, #tpu.memory_space<vmem>>, vector<8x128xf32>
    %c0_1 = arith.constant 0 : index
    %c0_2 = arith.constant 0 : index
    %1 = vector.load %arg2[%c0_1, %c0_2] : memref<128x128xf32, #tpu.memory_space<vmem>>, vector<128x128xf32>
    %cst = arith.constant dense<0.000000e+00> : vector<8x128xf32>
    %2 = tpu.matmul %0, %1, %cst {dimension_numbers = #tpu.dot_dimension_numbers<[1], [0], [0], [1], [0, 0, 1, 1], [], []>} : vector<8x128xf32>, vector<128x128xf32>, vector<8x128xf32> -> vector<8x128xf32>
    %c0_3 = arith.constant 0 : index
    %c0_4 = arith.constant 0 : index
    %3 = vector.load %arg3[%c0_3, %c0_4] : memref<1x128xf32, #tpu.memory_space<vmem>>, vector<1x128xf32>
    %4 = vector.broadcast %3 : vector<1x128xf32> to vector<8x128xf32>
    %5 = arith.addf %2, %4 : vector<8x128xf32>
    %6 = math.tanh %5 : vector<8x128xf32>
    %c0_5 = arith.constant 0 : index
    %c0_6 = arith.constant 0 : index
    %7 = vector.load %arg4[%c0_5, %c0_6] : memref<128x128xf32, #tpu.memory_space<vmem>>, vector<128x128xf32>
    %cst_7 = arith.constant dense<0.000000e+00> : vector<8x128xf32>
    %8 = tpu.matmul %6, %7, %cst_7 {dimension_numbers = #tpu.dot_dimension_numbers<[1], [0], [0], [1], [0, 0, 1, 1], [], []>} : vector<8x128xf32>, vector<128x128xf32>, vector<8x128xf32> -> vector<8x128xf32>
    %c0_8 = arith.constant 0 : index
    %c0_9 = arith.constant 0 : index
    %9 = vector.load %arg5[%c0_8, %c0_9] : memref<1x128xf32, #tpu.memory_space<vmem>>, vector<1x128xf32>
    %10 = vector.broadcast %9 : vector<1x128xf32> to vector<8x128xf32>
    %11 = arith.addf %8, %10 : vector<8x128xf32>
    %c0_10 = arith.constant 0 : index
    %c0_11 = arith.constant 0 : index
    %12 = vector.load %arg6[%c0_10, %c0_11] : memref<8x128xf32, #tpu.memory_space<vmem>>, vector<8x128xf32>
    tpu.vector_store %arg6[%c0_10, %c0_11], %11 {strides = array<i32>} : memref<8x128xf32, #tpu.memory_space<vmem>>, vector<8x128xf32>,
    return
  }
  func.func @transform_0(%arg0: i32) -> (i32, i32) {
    %c0_i32 = arith.constant 0 : i32
    %c0_i32_0 = arith.constant 0 : i32
    return %arg0, %c0_i32 : i32, i32
  }
  func.func @transform_1(%arg0: i32) -> (i32, i32) {
    %c0_i32 = arith.constant 0 : i32
    %c0_i32_0 = arith.constant 0 : i32
    %c0_i32_1 = arith.constant 0 : i32
    return %c0_i32, %c0_i32_0 : i32, i32
  }
  func.func @transform_2(%arg0: i32) -> (i32, i32) {
    %c0_i32 = arith.constant 0 : i32
    %c0_i32_0 = arith.constant 0 : i32
    %c0_i32_1 = arith.constant 0 : i32
    return %c0_i32, %c0_i32_0 : i32, i32
  }
  func.func @transform_3(%arg0: i32) -> (i32, i32) {
    %c0_i32 = arith.constant 0 : i32
    %c0_i32_0 = arith.constant 0 : i32
    %c0_i32_1 = arith.constant 0 : i32
    return %c0_i32, %c0_i32_0 : i32, i32
  }
  func.func @transform_4(%arg0: i32) -> (i32, i32) {
    %c0_i32 = arith.constant 0 : i32
    %c0_i32_0 = arith.constant 0 : i32
    %c0_i32_1 = arith.constant 0 : i32
    return %c0_i32, %c0_i32_0 : i32, i32
  }
  func.func @transform_5(%arg0: i32) -> (i32, i32) {
    %c0_i32 = arith.constant 0 : i32
    %c0_i32_0 = arith.constant 0 : i32
    return %arg0, %c0_i32 : i32, i32
  }
}

module attributes {stable_mosaic.version = 11 : i64} {
  func.func @_concat_head_kernel(%arg0: i32, %arg1: memref<8x128xf32, #tpu.memory_space<vmem>>, %arg2: memref<128x128xf32, #tpu.memory_space<vmem>>, %arg3: memref<1x128xf32, #tpu.memory_space<vmem>>, %arg4: memref<128x128xf32, #tpu.memory_space<vmem>>, %arg5: memref<1x128xf32, #tpu.memory_space<vmem>>, %arg6: memref<8x128xf32, #tpu.memory_space<vmem>>) attributes {dimension_semantics = [#tpu.dimension_semantics<parallel>], iteration_bounds = array<i64: 1>, scalar_prefetch = 0 : i64, scratch_operands = 0 : i64, tpu.core_type = #tpu.core_type<tc>, window_params = [{transform_indices = @transform_0, window_bounds = array<i64: 8, 128>}, {pipeline_mode = #tpu.pipeline_mode<synchronous>, transform_indices = @transform_1, window_bounds = array<i64: 128, 128>}, {pipeline_mode = #tpu.pipeline_mode<synchronous>, transform_indices = @transform_2, window_bounds = array<i64: 1, 128>}, {pipeline_mode = #tpu.pipeline_mode<synchronous>, transform_indices = @transform_3, window_bounds = array<i64: 128, 128>}, {pipeline_mode = #tpu.pipeline_mode<synchronous>, transform_indices = @transform_4, window_bounds = array<i64: 1, 128>}, {transform_indices = @transform_5, window_bounds = array<i64: 8, 128>}]} {
    %c0 = arith.constant 0 : index
    %c0_0 = arith.constant 0 : index
    %0 = vector.load %arg1[%c0, %c0_0] : memref<8x128xf32, #tpu.memory_space<vmem>>, vector<8x128xf32>
    %c0_1 = arith.constant 0 : index
    %c0_2 = arith.constant 0 : index
    %1 = vector.load %arg2[%c0_1, %c0_2] : memref<128x128xf32, #tpu.memory_space<vmem>>, vector<128x128xf32>
    %cst = arith.constant dense<0.000000e+00> : vector<8x128xf32>
    %2 = tpu.matmul %0, %1, %cst {dimension_numbers = #tpu.dot_dimension_numbers<[1], [0], [0], [1], [0, 0, 1, 1], [], []>} : vector<8x128xf32>, vector<128x128xf32>, vector<8x128xf32> -> vector<8x128xf32>
    %c0_3 = arith.constant 0 : index
    %c0_4 = arith.constant 0 : index
    %3 = vector.load %arg3[%c0_3, %c0_4] : memref<1x128xf32, #tpu.memory_space<vmem>>, vector<1x128xf32>
    %4 = vector.broadcast %3 : vector<1x128xf32> to vector<8x128xf32>
    %5 = arith.addf %2, %4 : vector<8x128xf32>
    %6 = math.tanh %5 : vector<8x128xf32>
    %c0_5 = arith.constant 0 : index
    %c0_6 = arith.constant 0 : index
    %7 = vector.load %arg4[%c0_5, %c0_6] : memref<128x128xf32, #tpu.memory_space<vmem>>, vector<128x128xf32>
    %cst_7 = arith.constant dense<0.000000e+00> : vector<8x128xf32>
    %8 = tpu.matmul %6, %7, %cst_7 {dimension_numbers = #tpu.dot_dimension_numbers<[1], [0], [0], [1], [0, 0, 1, 1], [], []>} : vector<8x128xf32>, vector<128x128xf32>, vector<8x128xf32> -> vector<8x128xf32>
    %c0_8 = arith.constant 0 : index
    %c0_9 = arith.constant 0 : index
    %9 = vector.load %arg5[%c0_8, %c0_9] : memref<1x128xf32, #tpu.memory_space<vmem>>, vector<1x128xf32>
    %10 = vector.broadcast %9 : vector<1x128xf32> to vector<8x128xf32>
    %11 = arith.addf %8, %10 : vector<8x128xf32>
    %c0_10 = arith.constant 0 : index
    %c0_11 = arith.constant 0 : index
    %12 = vector.load %arg6[%c0_10, %c0_11] : memref<8x128xf32, #tpu.memory_space<vmem>>, vector<8x128xf32>
    tpu.vector_store %arg6[%c0_10, %c0_11], %11 {strides = array<i32>} : memref<8x128xf32, #tpu.memory_space<vmem>>, vector<8x128xf32>,
    return
  }
  func.func @transform_0(%arg0: i32) -> (i32, i32) {
    %c0_i32 = arith.constant 0 : i32
    %c0_i32_0 = arith.constant 0 : i32
    return %arg0, %c0_i32 : i32, i32
  }
  func.func @transform_1(%arg0: i32) -> (i32, i32) {
    %c0_i32 = arith.constant 0 : i32
    %c0_i32_0 = arith.constant 0 : i32
    %c0_i32_1 = arith.constant 0 : i32
    return %c0_i32, %c0_i32_0 : i32, i32
  }
  func.func @transform_2(%arg0: i32) -> (i32, i32) {
    %c0_i32 = arith.constant 0 : i32
    %c0_i32_0 = arith.constant 0 : i32
    %c0_i32_1 = arith.constant 0 : i32
    return %c0_i32, %c0_i32_0 : i32, i32
  }
  func.func @transform_3(%arg0: i32) -> (i32, i32) {
    %c0_i32 = arith.constant 0 : i32
    %c0_i32_0 = arith.constant 0 : i32
    %c0_i32_1 = arith.constant 0 : i32
    return %c0_i32, %c0_i32_0 : i32, i32
  }
  func.func @transform_4(%arg0: i32) -> (i32, i32) {
    %c0_i32 = arith.constant 0 : i32
    %c0_i32_0 = arith.constant 0 : i32
    %c0_i32_1 = arith.constant 0 : i32
    return %c0_i32, %c0_i32_0 : i32, i32
  }
  func.func @transform_5(%arg0: i32) -> (i32, i32) {
    %c0_i32 = arith.constant 0 : i32
    %c0_i32_0 = arith.constant 0 : i32
    return %arg0, %c0_i32 : i32, i32
  }
}

</mosaic_0001>

<llo_original>
// kernel: tpu_custom_call.1
$region0: #{tpu_custom_call.1}
  #allocation0 [shape = 'u32[]', space=smem, size = 0x4, offset = 0x4, fixed_abs, tag = 'smem constant byte address 0x4 - core index']
  #allocation1 [shape = 'u32[144,128]{1,0:T(1,128)}', space=vmem, size = 0x12000, scoped, tag = 'internal scratch']
  %s0 = inlined_call_operand.hbm [shape: f32[8,128], index: 0, kind: input, shape index: {}]
  %s1 = inlined_call_operand.hbm [shape: f32[128,128], index: 1, kind: input, shape index: {}]
  %s2 = inlined_call_operand.vmem [shape: f32[1,128], index: 2, kind: input, shape index: {}]
  %s3 = inlined_call_operand.hbm [shape: f32[128,128], index: 3, kind: input, shape index: {}]
  %s4 = inlined_call_operand.vmem [shape: f32[1,128], index: 4, kind: input, shape index: {}]
  %s5 = inlined_call_operand.hbm [shape: f32[8,128], index: 5, kind: output, shape index: {}]
  %s6 = sld [smem:[#allocation0]]
  $region42: #{tpu_custom_call.1} parent=0
    _
  %s8 = ssub.s32 1, %s6
  %s9 = scalar_select 0, %s8, %s6
  $region1: #{tpu_custom_call.1} parent=0
    #allocation2 [shape = 'u8[4096]{0}', space=vmem, size = 0x1000, scoped, tag = 'input window, operand 0, single buffered']
    #allocation3 [shape = 's32[1]{0}', space=sflag, size = 0x4, scoped, tag = 'scoped memory for tpu_custom_call.1']
    #allocation4 [shape = 's32[1]{0}', space=sflag, size = 0x4, scoped, tag = 'scoped memory for tpu_custom_call.1']
    #allocation5 [shape = 'u8[65536]{0}', space=vmem, size = 0x10000, scoped, tag = 'input window, operand 1, single buffered']
    #allocation6 [shape = 's32[1]{0}', space=sflag, size = 0x4, scoped, tag = 'scoped memory for tpu_custom_call.1']
    #allocation7 [shape = 'u8[65536]{0}', space=vmem, size = 0x10000, scoped, tag = 'input window, operand 3, single buffered']
    #allocation8 [shape = 'u8[4096]{0}', space=vmem, size = 0x1000, scoped, tag = 'output window, operand 0, single buffered']
    %10 = vsyncpa [#allocation3], 0
    %11 = vsyncpa [#allocation6], 0
    %12 = vsyncpa [#allocation4], 0
    // Predicated region
    $region2: #{tpu_custom_call.1} parent=1 // pred_check
      _
    $region3: #{tpu_custom_call.1} parent=1 // pred_check_branch
      %14 = sbr.rel (0) target = $region5
    $region4: #{tpu_custom_call.1} parent=1 // pred_region
      %s16 = ssub.s32 128, 128
      %17 = vsyncadd [#allocation3], %s16
      %s19 = sshll.u32 [#allocation2], 4
      %s20 = int_to_ptr.vmem [resolvable:$true] %s19
      %22 = dma.hbm_to_vmem [thread:$0]  %s0, 128, %s20, [#allocation3]
    $region5: #{tpu_custom_call.1} parent=1 // pred_fallthru
      _
    // Predicated region
    $region6: #{tpu_custom_call.1} parent=1 // pred_check
      _
    $region7: #{tpu_custom_call.1} parent=1 // pred_check_branch
      %24 = sbr.rel (0) target = $region9
    $region8: #{tpu_custom_call.1} parent=1 // pred_region
      %s26 = ssub.s32 2048, 2048
      %27 = vsyncadd [#allocation6], %s26
      %s28 = sshll.u32 [#allocation5], 4
      %s29 = int_to_ptr.vmem [resolvable:$true] %s28
      %34 = dma.hbm_to_vmem [thread:$0]  %s1, 2048, %s29, [#allocation6], 128, 128, 8
    $region9: #{tpu_custom_call.1} parent=1 // pred_fallthru
      _
    // Predicated region
    $region10: #{tpu_custom_call.1} parent=1 // pred_check
      _
    $region11: #{tpu_custom_call.1} parent=1 // pred_check_branch
      %36 = sbr.rel (0) target = $region13
    $region12: #{tpu_custom_call.1} parent=1 // pred_region
      _
    $region13: #{tpu_custom_call.1} parent=1 // pred_fallthru
      _
    // Predicated region
    $region14: #{tpu_custom_call.1} parent=1 // pred_check
      _
    $region15: #{tpu_custom_call.1} parent=1 // pred_check_branch
      %38 = sbr.rel (0) target = $region17
    $region16: #{tpu_custom_call.1} parent=1 // pred_region
      %s40 = ssub.s32 2048, 2048
      %41 = vsyncadd [#allocation6], %s40
      %s42 = sshll.u32 [#allocation7], 4
      %s43 = int_to_ptr.vmem [resolvable:$true] %s42
      %48 = dma.hbm_to_vmem [thread:$0]  %s3, 2048, %s43, [#allocation6], 128, 128, 8
    $region17: #{tpu_custom_call.1} parent=1 // pred_fallthru
      _
    // Predicated region
    $region18: #{tpu_custom_call.1} parent=1 // pred_check
      _
    $region19: #{tpu_custom_call.1} parent=1 // pred_check_branch
      %50 = sbr.rel (0) target = $region21
    $region20: #{tpu_custom_call.1} parent=1 // pred_region
      _
    $region21: #{tpu_custom_call.1} parent=1 // pred_fallthru
      _
    // Predicated region
    $region22: #{tpu_custom_call.1} parent=1 // pred_check
      _
    $region23: #{tpu_custom_call.1} parent=1 // pred_check_branch
      %52 = sbr.rel (0) target = $region25
    $region24: #{tpu_custom_call.1} parent=1 // pred_region
      %53 = dma.done [#allocation3], 128
    $region25: #{tpu_custom_call.1} parent=1 // pred_fallthru
      _
    // Predicated region
    $region26: #{tpu_custom_call.1} parent=1 // pred_check
      _
    $region27: #{tpu_custom_call.1} parent=1 // pred_check_branch
      %55 = sbr.rel (0) target = $region29
    $region28: #{tpu_custom_call.1} parent=1 // pred_region
      %56 = dma.done [#allocation6], 2048
    $region29: #{tpu_custom_call.1} parent=1 // pred_fallthru
      _
    // Predicated region
    $region30: #{tpu_custom_call.1} parent=1 // pred_check
      _
    $region31: #{tpu_custom_call.1} parent=1 // pred_check_branch
      %58 = sbr.rel (0) target = $region33
    $region32: #{tpu_custom_call.1} parent=1 // pred_region
      %59 = dma.done [#allocation6], 2048
    $region33: #{tpu_custom_call.1} parent=1 // pred_fallthru
      _
    %v60 = vld [vmem:[#allocation2] sm:$0xff]
    %v61 = vld [vmem:[#allocation5] sm:$0xff]
    %v62 = vld [vmem:[#allocation5 + $0x8] sm:$0xff]
    %v63 = vld [vmem:[#allocation5 + $0x10] sm:$0xff]
    %v64 = vld [vmem:[#allocation5 + $0x18] sm:$0xff]
    %v65 = vld [vmem:[#allocation5 + $0x20] sm:$0xff]
    %v66 = vld [vmem:[#allocation5 + $0x28] sm:$0xff]
    %v67 = vld [vmem:[#allocation5 + $0x30] sm:$0xff]
    %v68 = vld [vmem:[#allocation5 + $0x38] sm:$0xff]
    %v69 = vld [vmem:[#allocation5 + $0x40] sm:$0xff]
    %v70 = vld [vmem:[#allocation5 + $0x48] sm:$0xff]
    %v71 = vld [vmem:[#allocation5 + $0x50] sm:$0xff]
    %v72 = vld [vmem:[#allocation5 + $0x58] sm:$0xff]
    %v73 = vld [vmem:[#allocation5 + $0x60] sm:$0xff]
    %v74 = vld [vmem:[#allocation5 + $0x68] sm:$0xff]
    %v75 = vld [vmem:[#allocation5 + $0x70] sm:$0xff]
    %v76 = vld [vmem:[#allocation5 + $0x78] sm:$0xff]
    %v77 = vld [vmem:[%s2] sm:$0x1]
    %v79 = vlaneseq
    %v80 = vshrl.u32 %v79, 7
    %v81 = vsub.s32 0, %v80
    %v82 = vrot.slane %v77, %v81
    %84 = vmatprep.subr.mxu0 0.0
    %85 = vmatpush1.msra.mxu0 %v76
    %86 = vmatprep.subr.mxu0 0.0
    %87 = vmatpush1.msra.mxu0 %v75
    %88 = vmatprep.subr.mxu0 0.0
    %89 = vmatpush1.msra.mxu0 %v74
    %90 = vmatprep.subr.mxu0 0.0
    %91 = vmatpush1.msra.mxu0 %v73
    %92 = vmatprep.subr.mxu0 0.0
    %93 = vmatpush1.msra.mxu0 %v72
    %94 = vmatprep.subr.mxu0 0.0
    %95 = vmatpush1.msra.mxu0 %v71
    %96 = vmatprep.subr.mxu0 0.0
    %97 = vmatpush1.msra.mxu0 %v70
    %98 = vmatprep.subr.mxu0 0.0
    %99 = vmatpush1.msra.mxu0 %v69
    %100 = vmatprep.subr.mxu0 0.0
    %101 = vmatpush1.msra.mxu0 %v68
    %102 = vmatprep.subr.mxu0 0.0
    %103 = vmatpush1.msra.mxu0 %v67
    %104 = vmatprep.subr.mxu0 0.0
    %105 = vmatpush1.msra.mxu0 %v66
    %106 = vmatprep.subr.mxu0 0.0
    %107 = vmatpush1.msra.mxu0 %v65
    %108 = vmatprep.subr.mxu0 0.0
    %109 = vmatpush1.msra.mxu0 %v64
    %110 = vmatprep.subr.mxu0 0.0
    %111 = vmatpush1.msra.mxu0 %v63
    %112 = vmatprep.subr.mxu0 0.0
    %113 = vmatpush1.msra.mxu0 %v62
    %114 = vmatprep.subr.mxu0 0.0
    %115 = vmatpush1.msra.mxu0 %v61
    %116 = vmatprep.subr.mxu0 0.0
    %117 = vmatpush2.msra.mxu0 0.0
    %118 = vmatprep.subr.mxu0 0.0
    %119 = vmatpush2.msra.mxu0 0.0
    %120 = vmatprep.subr.mxu0 0.0
    %121 = vmatpush2.msra.mxu0 0.0
    %122 = vmatprep.subr.mxu0 0.0
    %123 = vmatpush2.msra.mxu0 0.0
    %124 = vmatprep.subr.mxu0 0.0
    %125 = vmatpush2.msra.mxu0 0.0
    %126 = vmatprep.subr.mxu0 0.0
    %127 = vmatpush2.msra.mxu0 0.0
    %128 = vmatprep.subr.mxu0 0.0
    %129 = vmatpush2.msra.mxu0 0.0
    %130 = vmatprep.subr.mxu0 0.0
    %131 = vmatpush2.msra.mxu0 0.0
    %132 = vmatprep.subr.mxu0 0.0
    %133 = vmatpush2.msra.mxu0 0.0
    %134 = vmatprep.subr.mxu0 0.0
    %135 = vmatpush2.msra.mxu0 0.0
    %136 = vmatprep.subr.mxu0 0.0
    %137 = vmatpush2.msra.mxu0 0.0
    %138 = vmatprep.subr.mxu0 0.0
    %139 = vmatpush2.msra.mxu0 0.0
    %140 = vmatprep.subr.mxu0 0.0
    %141 = vmatpush2.msra.mxu0 0.0
    %142 = vmatprep.subr.mxu0 0.0
    %143 = vmatpush2.msra.mxu0 0.0
    %144 = vmatprep.subr.mxu0 0.0
    %145 = vmatpush2.msra.mxu0 0.0
    %146 = vmatprep.subr.mxu0 0.0
    %147 = vmatpush2.msra.mxu0 0.0
    %148 = vmatprep.mubr.f32.mxu0 0.0
    %149 = vmatmul.mubr.f32.gmra.mxu0 %v60
    %v150 = vpop.f32.mrf.mxu0
    %v151 = vadd.f32 %v82, %v150
    %v152 = vpop.f32.mrf.mxu0
    %153 = vdwg.mxu0
    %v154 = vtanh.pop %v151
    %v155 = vld [vmem:[#allocation7] sm:$0xff]
    %v156 = vld [vmem:[#allocation7 + $0x8] sm:$0xff]
    %v157 = vld [vmem:[#allocation7 + $0x10] sm:$0xff]
    %v158 = vld [vmem:[#allocation7 + $0x18] sm:$0xff]
    %v159 = vld [vmem:[#allocation7 + $0x20] sm:$0xff]
    %v160 = vld [vmem:[#allocation7 + $0x28] sm:$0xff]
    %v161 = vld [vmem:[#allocation7 + $0x30] sm:$0xff]
    %v162 = vld [vmem:[#allocation7 + $0x38] sm:$0xff]
    %v163 = vld [vmem:[#allocation7 + $0x40] sm:$0xff]
    %v164 = vld [vmem:[#allocation7 + $0x48] sm:$0xff]
    %v165 = vld [vmem:[#allocation7 + $0x50] sm:$0xff]
    %v166 = vld [vmem:[#allocation7 + $0x58] sm:$0xff]
    %v167 = vld [vmem:[#allocation7 + $0x60] sm:$0xff]
    %v168 = vld [vmem:[#allocation7 + $0x68] sm:$0xff]
    %v169 = vld [vmem:[#allocation7 + $0x70] sm:$0xff]
    %v170 = vld [vmem:[#allocation7 + $0x78] sm:$0xff]
    %v171 = vld [vmem:[%s4] sm:$0x1]
    %v173 = vlaneseq
    %v174 = vshrl.u32 %v173, 7
    %v175 = vsub.s32 0, %v174
    %v176 = vrot.slane %v171, %v175
    %178 = vmatprep.subr.mxu0 0.0
    %179 = vmatpush1.msra.mxu0 %v170
    %180 = vmatprep.subr.mxu0 0.0
    %181 = vmatpush1.msra.mxu0 %v169
    %182 = vmatprep.subr.mxu0 0.0
    %183 = vmatpush1.msra.mxu0 %v168
    %184 = vmatprep.subr.mxu0 0.0
    %185 = vmatpush1.msra.mxu0 %v167
    %186 = vmatprep.subr.mxu0 0.0
    %187 = vmatpush1.msra.mxu0 %v166
    %188 = vmatprep.subr.mxu0 0.0
    %189 = vmatpush1.msra.mxu0 %v165
    %190 = vmatprep.subr.mxu0 0.0
    %191 = vmatpush1.msra.mxu0 %v164
    %192 = vmatprep.subr.mxu0 0.0
    %193 = vmatpush1.msra.mxu0 %v163
    %194 = vmatprep.subr.mxu0 0.0
    %195 = vmatpush1.msra.mxu0 %v162
    %196 = vmatprep.subr.mxu0 0.0
    %197 = vmatpush1.msra.mxu0 %v161
    %198 = vmatprep.subr.mxu0 0.0
    %199 = vmatpush1.msra.mxu0 %v160
    %200 = vmatprep.subr.mxu0 0.0
    %201 = vmatpush1.msra.mxu0 %v159
    %202 = vmatprep.subr.mxu0 0.0
    %203 = vmatpush1.msra.mxu0 %v158
    %204 = vmatprep.subr.mxu0 0.0
    %205 = vmatpush1.msra.mxu0 %v157
    %206 = vmatprep.subr.mxu0 0.0
    %207 = vmatpush1.msra.mxu0 %v156
    %208 = vmatprep.subr.mxu0 0.0
    %209 = vmatpush1.msra.mxu0 %v155
    %210 = vmatprep.subr.mxu0 0.0
    %211 = vmatpush2.msra.mxu0 0.0
    %212 = vmatprep.subr.mxu0 0.0
    %213 = vmatpush2.msra.mxu0 0.0
    %214 = vmatprep.subr.mxu0 0.0
    %215 = vmatpush2.msra.mxu0 0.0
    %216 = vmatprep.subr.mxu0 0.0
    %217 = vmatpush2.msra.mxu0 0.0
    %218 = vmatprep.subr.mxu0 0.0
    %219 = vmatpush2.msra.mxu0 0.0
    %220 = vmatprep.subr.mxu0 0.0
    %221 = vmatpush2.msra.mxu0 0.0
    %222 = vmatprep.subr.mxu0 0.0
    %223 = vmatpush2.msra.mxu0 0.0
    %224 = vmatprep.subr.mxu0 0.0
    %225 = vmatpush2.msra.mxu0 0.0
    %226 = vmatprep.subr.mxu0 0.0
    %227 = vmatpush2.msra.mxu0 0.0
    %228 = vmatprep.subr.mxu0 0.0
    %229 = vmatpush2.msra.mxu0 0.0
    %230 = vmatprep.subr.mxu0 0.0
    %231 = vmatpush2.msra.mxu0 0.0
    %232 = vmatprep.subr.mxu0 0.0
    %233 = vmatpush2.msra.mxu0 0.0
    %234 = vmatprep.subr.mxu0 0.0
    %235 = vmatpush2.msra.mxu0 0.0
    %236 = vmatprep.subr.mxu0 0.0
    %237 = vmatpush2.msra.mxu0 0.0
    %238 = vmatprep.subr.mxu0 0.0
    %239 = vmatpush2.msra.mxu0 0.0
    %240 = vmatprep.subr.mxu0 0.0
    %241 = vmatpush2.msra.mxu0 0.0
    %242 = vmatprep.mubr.f32.mxu0 0.0
    %243 = vmatmul.mubr.f32.gmra.mxu0 %v154
    %v244 = vpop.f32.mrf.mxu0
    %v245 = vadd.f32 %v176, %v244
    %v246 = vpop.f32.mrf.mxu0
    %247 = vdwg.mxu0
    %248 = vst [vmem:[#allocation8] sm:$0xff] %v245
    // Predicated region
    $region34: #{tpu_custom_call.1} parent=1 // pred_check
      _
    $region35: #{tpu_custom_call.1} parent=1 // pred_check_branch
      %250 = sbr.rel (0) target = $region37
    $region36: #{tpu_custom_call.1} parent=1 // pred_region
      %s252 = ssub.s32 128, 128
      %253 = vsyncadd [#allocation4], %s252
      %s255 = sshll.u32 [#allocation8], 4
      %s256 = int_to_ptr.vmem [resolvable:$true] %s255
      %258 = dma.vmem_to_hbm [thread:$0]  %s256, 128, %s5, [#allocation4]
    $region37: #{tpu_custom_call.1} parent=1 // pred_fallthru
      _
    // Predicated region
    $region38: #{tpu_custom_call.1} parent=1 // pred_check
      _
    $region39: #{tpu_custom_call.1} parent=1 // pred_check_branch
      %260 = sbr.rel (0) target = $region41
    $region40: #{tpu_custom_call.1} parent=1 // pred_region
      %261 = dma.done [#allocation4], 128
    $region41: #{tpu_custom_call.1} parent=1 // pred_fallthru
      _
    %262 = vsyncpa [#allocation3], 1
    %263 = vsyncpa [#allocation6], 1
    %264 = vsyncpa [#allocation4], 1

// kernel: tpu_custom_call.1
$region0: #{tpu_custom_call.1}
  #allocation0 [shape = 'u32[]', space=smem, size = 0x4, offset = 0x4, fixed_abs, tag = 'smem constant byte address 0x4 - core index']
  #allocation1 [shape = 'u32[144,128]{1,0:T(1,128)}', space=vmem, size = 0x12000, scoped, tag = 'internal scratch']
  %s0 = inlined_call_operand.hbm [shape: f32[8,128], index: 0, kind: input, shape index: {}]
  %s1 = inlined_call_operand.hbm [shape: f32[128,128], index: 1, kind: input, shape index: {}]
  %s2 = inlined_call_operand.vmem [shape: f32[1,128], index: 2, kind: input, shape index: {}]
  %s3 = inlined_call_operand.hbm [shape: f32[128,128], index: 3, kind: input, shape index: {}]
  %s4 = inlined_call_operand.vmem [shape: f32[1,128], index: 4, kind: input, shape index: {}]
  %s5 = inlined_call_operand.hbm [shape: f32[8,128], index: 5, kind: output, shape index: {}]
  %s6 = sld [smem:[#allocation0]]
  $region42: #{tpu_custom_call.1} parent=0
    _
  %s8 = ssub.s32 1, %s6
  %s9 = scalar_select 0, %s8, %s6
  $region1: #{tpu_custom_call.1} parent=0
    #allocation2 [shape = 'u8[4096]{0}', space=vmem, size = 0x1000, scoped, tag = 'input window, operand 0, single buffered']
    #allocation3 [shape = 's32[1]{0}', space=sflag, size = 0x4, scoped, tag = 'scoped memory for tpu_custom_call.1']
    #allocation4 [shape = 's32[1]{0}', space=sflag, size = 0x4, scoped, tag = 'scoped memory for tpu_custom_call.1']
    #allocation5 [shape = 'u8[65536]{0}', space=vmem, size = 0x10000, scoped, tag = 'input window, operand 1, single buffered']
    #allocation6 [shape = 's32[1]{0}', space=sflag, size = 0x4, scoped, tag = 'scoped memory for tpu_custom_call.1']
    #allocation7 [shape = 'u8[65536]{0}', space=vmem, size = 0x10000, scoped, tag = 'input window, operand 3, single buffered']
    #allocation8 [shape = 'u8[4096]{0}', space=vmem, size = 0x1000, scoped, tag = 'output window, operand 0, single buffered']
    %10 = vsyncpa [#allocation3], 0
    %11 = vsyncpa [#allocation6], 0
    %12 = vsyncpa [#allocation4], 0
    // Predicated region
    $region2: #{tpu_custom_call.1} parent=1 // pred_check
      _
    $region3: #{tpu_custom_call.1} parent=1 // pred_check_branch
      %14 = sbr.rel (0) target = $region5
    $region4: #{tpu_custom_call.1} parent=1 // pred_region
      %s16 = ssub.s32 128, 128
      %17 = vsyncadd [#allocation3], %s16
      %s19 = sshll.u32 [#allocation2], 4
      %s20 = int_to_ptr.vmem [resolvable:$true] %s19
      %22 = dma.hbm_to_vmem [thread:$0]  %s0, 128, %s20, [#allocation3]
    $region5: #{tpu_custom_call.1} parent=1 // pred_fallthru
      _
    // Predicated region
    $region6: #{tpu_custom_call.1} parent=1 // pred_check
      _
    $region7: #{tpu_custom_call.1} parent=1 // pred_check_branch
      %24 = sbr.rel (0) target = $region9
    $region8: #{tpu_custom_call.1} parent=1 // pred_region
      %s26 = ssub.s32 2048, 2048
      %27 = vsyncadd [#allocation6], %s26
      %s28 = sshll.u32 [#allocation5], 4
      %s29 = int_to_ptr.vmem [resolvable:$true] %s28
      %34 = dma.hbm_to_vmem [thread:$0]  %s1, 2048, %s29, [#allocation6], 128, 128, 8
    $region9: #{tpu_custom_call.1} parent=1 // pred_fallthru
      _
    // Predicated region
    $region10: #{tpu_custom_call.1} parent=1 // pred_check
      _
    $region11: #{tpu_custom_call.1} parent=1 // pred_check_branch
      %36 = sbr.rel (0) target = $region13
    $region12: #{tpu_custom_call.1} parent=1 // pred_region
      _
    $region13: #{tpu_custom_call.1} parent=1 // pred_fallthru
      _
    // Predicated region
    $region14: #{tpu_custom_call.1} parent=1 // pred_check
      _
    $region15: #{tpu_custom_call.1} parent=1 // pred_check_branch
      %38 = sbr.rel (0) target = $region17
    $region16: #{tpu_custom_call.1} parent=1 // pred_region
      %s40 = ssub.s32 2048, 2048
      %41 = vsyncadd [#allocation6], %s40
      %s42 = sshll.u32 [#allocation7], 4
      %s43 = int_to_ptr.vmem [resolvable:$true] %s42
      %48 = dma.hbm_to_vmem [thread:$0]  %s3, 2048, %s43, [#allocation6], 128, 128, 8
    $region17: #{tpu_custom_call.1} parent=1 // pred_fallthru
      _
    // Predicated region
    $region18: #{tpu_custom_call.1} parent=1 // pred_check
      _
    $region19: #{tpu_custom_call.1} parent=1 // pred_check_branch
      %50 = sbr.rel (0) target = $region21
    $region20: #{tpu_custom_call.1} parent=1 // pred_region
      _
    $region21: #{tpu_custom_call.1} parent=1 // pred_fallthru
      _
    // Predicated region
    $region22: #{tpu_custom_call.1} parent=1 // pred_check
      _
    $region23: #{tpu_custom_call.1} parent=1 // pred_check_branch
      %52 = sbr.rel (0) target = $region25
    $region24: #{tpu_custom_call.1} parent=1 // pred_region
      %53 = dma.done [#allocation3], 128
    $region25: #{tpu_custom_call.1} parent=1 // pred_fallthru
      _
    // Predicated region
    $region26: #{tpu_custom_call.1} parent=1 // pred_check
      _
    $region27: #{tpu_custom_call.1} parent=1 // pred_check_branch
      %55 = sbr.rel (0) target = $region29
    $region28: #{tpu_custom_call.1} parent=1 // pred_region
      %56 = dma.done [#allocation6], 2048
    $region29: #{tpu_custom_call.1} parent=1 // pred_fallthru
      _
    // Predicated region
    $region30: #{tpu_custom_call.1} parent=1 // pred_check
      _
    $region31: #{tpu_custom_call.1} parent=1 // pred_check_branch
      %58 = sbr.rel (0) target = $region33
    $region32: #{tpu_custom_call.1} parent=1 // pred_region
      %59 = dma.done [#allocation6], 2048
    $region33: #{tpu_custom_call.1} parent=1 // pred_fallthru
      _
    %v60 = vld [vmem:[#allocation2] sm:$0xff]
    %v61 = vld [vmem:[#allocation5] sm:$0xff]
    %v62 = vld [vmem:[#allocation5 + $0x8] sm:$0xff]
    %v63 = vld [vmem:[#allocation5 + $0x10] sm:$0xff]
    %v64 = vld [vmem:[#allocation5 + $0x18] sm:$0xff]
    %v65 = vld [vmem:[#allocation5 + $0x20] sm:$0xff]
    %v66 = vld [vmem:[#allocation5 + $0x28] sm:$0xff]
    %v67 = vld [vmem:[#allocation5 + $0x30] sm:$0xff]
    %v68 = vld [vmem:[#allocation5 + $0x38] sm:$0xff]
    %v69 = vld [vmem:[#allocation5 + $0x40] sm:$0xff]
    %v70 = vld [vmem:[#allocation5 + $0x48] sm:$0xff]
    %v71 = vld [vmem:[#allocation5 + $0x50] sm:$0xff]
    %v72 = vld [vmem:[#allocation5 + $0x58] sm:$0xff]
    %v73 = vld [vmem:[#allocation5 + $0x60] sm:$0xff]
    %v74 = vld [vmem:[#allocation5 + $0x68] sm:$0xff]
    %v75 = vld [vmem:[#allocation5 + $0x70] sm:$0xff]
    %v76 = vld [vmem:[#allocation5 + $0x78] sm:$0xff]
    %v77 = vld [vmem:[%s2] sm:$0x1]
    %v79 = vlaneseq
    %v80 = vshrl.u32 %v79, 7
    %v81 = vsub.s32 0, %v80
    %v82 = vrot.slane %v77, %v81
    %84 = vmatprep.subr.mxu0 0.0
    %85 = vmatpush1.msra.mxu0 %v76
    %86 = vmatprep.subr.mxu0 0.0
    %87 = vmatpush1.msra.mxu0 %v75
    %88 = vmatprep.subr.mxu0 0.0
    %89 = vmatpush1.msra.mxu0 %v74
    %90 = vmatprep.subr.mxu0 0.0
    %91 = vmatpush1.msra.mxu0 %v73
    %92 = vmatprep.subr.mxu0 0.0
    %93 = vmatpush1.msra.mxu0 %v72
    %94 = vmatprep.subr.mxu0 0.0
    %95 = vmatpush1.msra.mxu0 %v71
    %96 = vmatprep.subr.mxu0 0.0
    %97 = vmatpush1.msra.mxu0 %v70
    %98 = vmatprep.subr.mxu0 0.0
    %99 = vmatpush1.msra.mxu0 %v69
    %100 = vmatprep.subr.mxu0 0.0
    %101 = vmatpush1.msra.mxu0 %v68
    %102 = vmatprep.subr.mxu0 0.0
    %103 = vmatpush1.msra.mxu0 %v67
    %104 = vmatprep.subr.mxu0 0.0
    %105 = vmatpush1.msra.mxu0 %v66
    %106 = vmatprep.subr.mxu0 0.0
    %107 = vmatpush1.msra.mxu0 %v65
    %108 = vmatprep.subr.mxu0 0.0
    %109 = vmatpush1.msra.mxu0 %v64
    %110 = vmatprep.subr.mxu0 0.0
    %111 = vmatpush1.msra.mxu0 %v63
    %112 = vmatprep.subr.mxu0 0.0
    %113 = vmatpush1.msra.mxu0 %v62
    %114 = vmatprep.subr.mxu0 0.0
    %115 = vmatpush1.msra.mxu0 %v61
    %116 = vmatprep.subr.mxu0 0.0
    %117 = vmatpush2.msra.mxu0 0.0
    %118 = vmatprep.subr.mxu0 0.0
    %119 = vmatpush2.msra.mxu0 0.0
    %120 = vmatprep.subr.mxu0 0.0
    %121 = vmatpush2.msra.mxu0 0.0
    %122 = vmatprep.subr.mxu0 0.0
    %123 = vmatpush2.msra.mxu0 0.0
    %124 = vmatprep.subr.mxu0 0.0
    %125 = vmatpush2.msra.mxu0 0.0
    %126 = vmatprep.subr.mxu0 0.0
    %127 = vmatpush2.msra.mxu0 0.0
    %128 = vmatprep.subr.mxu0 0.0
    %129 = vmatpush2.msra.mxu0 0.0
    %130 = vmatprep.subr.mxu0 0.0
    %131 = vmatpush2.msra.mxu0 0.0
    %132 = vmatprep.subr.mxu0 0.0
    %133 = vmatpush2.msra.mxu0 0.0
    %134 = vmatprep.subr.mxu0 0.0
    %135 = vmatpush2.msra.mxu0 0.0
    %136 = vmatprep.subr.mxu0 0.0
    %137 = vmatpush2.msra.mxu0 0.0
    %138 = vmatprep.subr.mxu0 0.0
    %139 = vmatpush2.msra.mxu0 0.0
    %140 = vmatprep.subr.mxu0 0.0
    %141 = vmatpush2.msra.mxu0 0.0
    %142 = vmatprep.subr.mxu0 0.0
    %143 = vmatpush2.msra.mxu0 0.0
    %144 = vmatprep.subr.mxu0 0.0
    %145 = vmatpush2.msra.mxu0 0.0
    %146 = vmatprep.subr.mxu0 0.0
    %147 = vmatpush2.msra.mxu0 0.0
    %148 = vmatprep.mubr.f32.mxu0 0.0
    %149 = vmatmul.mubr.f32.gmra.mxu0 %v60
    %v150 = vpop.f32.mrf.mxu0
    %v151 = vadd.f32 %v82, %v150
    %v152 = vpop.f32.mrf.mxu0
    %153 = vdwg.mxu0
    %v154 = vtanh.pop %v151
    %v155 = vld [vmem:[#allocation7] sm:$0xff]
    %v156 = vld [vmem:[#allocation7 + $0x8] sm:$0xff]
    %v157 = vld [vmem:[#allocation7 + $0x10] sm:$0xff]
    %v158 = vld [vmem:[#allocation7 + $0x18] sm:$0xff]
    %v159 = vld [vmem:[#allocation7 + $0x20] sm:$0xff]
    %v160 = vld [vmem:[#allocation7 + $0x28] sm:$0xff]
    %v161 = vld [vmem:[#allocation7 + $0x30] sm:$0xff]
    %v162 = vld [vmem:[#allocation7 + $0x38] sm:$0xff]
    %v163 = vld [vmem:[#allocation7 + $0x40] sm:$0xff]
    %v164 = vld [vmem:[#allocation7 + $0x48] sm:$0xff]
    %v165 = vld [vmem:[#allocation7 + $0x50] sm:$0xff]
    %v166 = vld [vmem:[#allocation7 + $0x58] sm:$0xff]
    %v167 = vld [vmem:[#allocation7 + $0x60] sm:$0xff]
    %v168 = vld [vmem:[#allocation7 + $0x68] sm:$0xff]
    %v169 = vld [vmem:[#allocation7 + $0x70] sm:$0xff]
    %v170 = vld [vmem:[#allocation7 + $0x78] sm:$0xff]
    %v171 = vld [vmem:[%s4] sm:$0x1]
    %v173 = vlaneseq
    %v174 = vshrl.u32 %v173, 7
    %v175 = vsub.s32 0, %v174
    %v176 = vrot.slane %v171, %v175
    %178 = vmatprep.subr.mxu0 0.0
    %179 = vmatpush1.msra.mxu0 %v170
    %180 = vmatprep.subr.mxu0 0.0
    %181 = vmatpush1.msra.mxu0 %v169
    %182 = vmatprep.subr.mxu0 0.0
    %183 = vmatpush1.msra.mxu0 %v168
    %184 = vmatprep.subr.mxu0 0.0
    %185 = vmatpush1.msra.mxu0 %v167
    %186 = vmatprep.subr.mxu0 0.0
    %187 = vmatpush1.msra.mxu0 %v166
    %188 = vmatprep.subr.mxu0 0.0
    %189 = vmatpush1.msra.mxu0 %v165
    %190 = vmatprep.subr.mxu0 0.0
    %191 = vmatpush1.msra.mxu0 %v164
    %192 = vmatprep.subr.mxu0 0.0
    %193 = vmatpush1.msra.mxu0 %v163
    %194 = vmatprep.subr.mxu0 0.0
    %195 = vmatpush1.msra.mxu0 %v162
    %196 = vmatprep.subr.mxu0 0.0
    %197 = vmatpush1.msra.mxu0 %v161
    %198 = vmatprep.subr.mxu0 0.0
    %199 = vmatpush1.msra.mxu0 %v160
    %200 = vmatprep.subr.mxu0 0.0
    %201 = vmatpush1.msra.mxu0 %v159
    %202 = vmatprep.subr.mxu0 0.0
    %203 = vmatpush1.msra.mxu0 %v158
    %204 = vmatprep.subr.mxu0 0.0
    %205 = vmatpush1.msra.mxu0 %v157
    %206 = vmatprep.subr.mxu0 0.0
    %207 = vmatpush1.msra.mxu0 %v156
    %208 = vmatprep.subr.mxu0 0.0
    %209 = vmatpush1.msra.mxu0 %v155
    %210 = vmatprep.subr.mxu0 0.0
    %211 = vmatpush2.msra.mxu0 0.0
    %212 = vmatprep.subr.mxu0 0.0
    %213 = vmatpush2.msra.mxu0 0.0
    %214 = vmatprep.subr.mxu0 0.0
    %215 = vmatpush2.msra.mxu0 0.0
    %216 = vmatprep.subr.mxu0 0.0
    %217 = vmatpush2.msra.mxu0 0.0
    %218 = vmatprep.subr.mxu0 0.0
    %219 = vmatpush2.msra.mxu0 0.0
    %220 = vmatprep.subr.mxu0 0.0
    %221 = vmatpush2.msra.mxu0 0.0
    %222 = vmatprep.subr.mxu0 0.0
    %223 = vmatpush2.msra.mxu0 0.0
    %224 = vmatprep.subr.mxu0 0.0
    %225 = vmatpush2.msra.mxu0 0.0
    %226 = vmatprep.subr.mxu0 0.0
    %227 = vmatpush2.msra.mxu0 0.0
    %228 = vmatprep.subr.mxu0 0.0
    %229 = vmatpush2.msra.mxu0 0.0
    %230 = vmatprep.subr.mxu0 0.0
    %231 = vmatpush2.msra.mxu0 0.0
    %232 = vmatprep.subr.mxu0 0.0
    %233 = vmatpush2.msra.mxu0 0.0
    %234 = vmatprep.subr.mxu0 0.0
    %235 = vmatpush2.msra.mxu0 0.0
    %236 = vmatprep.subr.mxu0 0.0
    %237 = vmatpush2.msra.mxu0 0.0
    %238 = vmatprep.subr.mxu0 0.0
    %239 = vmatpush2.msra.mxu0 0.0
    %240 = vmatprep.subr.mxu0 0.0
    %241 = vmatpush2.msra.mxu0 0.0
    %242 = vmatprep.mubr.f32.mxu0 0.0
    %243 = vmatmul.mubr.f32.gmra.mxu0 %v154
    %v244 = vpop.f32.mrf.mxu0
    %v245 = vadd.f32 %v176, %v244
    %v246 = vpop.f32.mrf.mxu0
    %247 = vdwg.mxu0
    %248 = vst [vmem:[#allocation8] sm:$0xff] %v245
    // Predicated region
    $region34: #{tpu_custom_call.1} parent=1 // pred_check
      _
    $region35: #{tpu_custom_call.1} parent=1 // pred_check_branch
      %250 = sbr.rel (0) target = $region37
    $region36: #{tpu_custom_call.1} parent=1 // pred_region
      %s252 = ssub.s32 128, 128
      %253 = vsyncadd [#allocation4], %s252
      %s255 = sshll.u32 [#allocation8], 4
      %s256 = int_to_ptr.vmem [resolvable:$true] %s255
      %258 = dma.vmem_to_hbm [thread:$0]  %s256, 128, %s5, [#allocation4]
    $region37: #{tpu_custom_call.1} parent=1 // pred_fallthru
      _
    // Predicated region
    $region38: #{tpu_custom_call.1} parent=1 // pred_check
      _
    $region39: #{tpu_custom_call.1} parent=1 // pred_check_branch
      %260 = sbr.rel (0) target = $region41
    $region40: #{tpu_custom_call.1} parent=1 // pred_region
      %261 = dma.done [#allocation4], 128
    $region41: #{tpu_custom_call.1} parent=1 // pred_fallthru
      _
    %262 = vsyncpa [#allocation3], 1
    %263 = vsyncpa [#allocation6], 1
    %264 = vsyncpa [#allocation4], 1

</llo_original>
